<compile_context>
chip_gen: v7x
topology: tpu7x:2x2x1
jax: 0.10.0
libtpu: 0.0.40
codegen_flags: <defaults>
</compile_context>

<pallas_src>
import itertools

import numpy as np
import jax
import jax.numpy as jnp
from jax.experimental import pallas as pl
from jax.experimental.pallas import tpu as pltpu


def _round_up(x: int, m: int) -> int:
    return ((x + m - 1) // m) * m


def _embed_lookup_kernel(idx_ref, tbl_ref, out_ref):
    # idx_ref: (TB, 1) int32 token indices
    # tbl_ref: (Vp, Ep) embedding table (fully resident)
    # out_ref: (TB, Ep) gathered embeddings
    idx = idx_ref[...]                                   # (TB, 1)
    tbl = tbl_ref[...]                                   # (Vp, Ep)
    tb = idx.shape[0]
    vp = tbl.shape[0]
    # One-hot rows via a lane iota compare (VPU), gather via matmul (MXU).
    iota = jax.lax.broadcasted_iota(jnp.int32, (tb, vp), 1)
    onehot = (iota == idx).astype(tbl.dtype)             # broadcast (TB,1) over lanes
    out_ref[...] = jnp.dot(
        onehot, tbl, preferred_element_type=jnp.float32
    ).astype(out_ref.dtype)


def embedding_lookup(indices, weight, *, row_block: int = 512):
    """out[i] = weight[indices[i]] via a Pallas TPU kernel (one-hot @ table)."""
    n = int(indices.shape[0])
    v, e = int(weight.shape[0]), int(weight.shape[1])
    if n == 0:
        return jnp.zeros((0, e), weight.dtype)

    vp = _round_up(v, 8)            # sublane-aligned contraction dim
    ep = _round_up(e, 128)          # lane-dense output (avoid masked stores)

    # Big token tiles; pad the token count instead of shrinking the tile.
    tb = row_block if n > row_block else max(8, _round_up(n, 8))
    n_pad = _round_up(n, tb)
    grid = (n_pad // tb,)

    idx2 = jnp.zeros((n_pad, 1), jnp.int32).at[:n, 0].set(indices.astype(jnp.int32))
    wpad = jnp.zeros((vp, ep), weight.dtype).at[:v, :e].set(weight)

    itemsize = np.dtype(weight.dtype).itemsize
    flops = 2 * n_pad * vp * ep
    bytes_accessed = (idx2.size * 4
                      + wpad.size * itemsize * grid[0]
                      + n_pad * ep * itemsize)

    out = pl.pallas_call(
        _embed_lookup_kernel,
        out_shape=jax.ShapeDtypeStruct((n_pad, ep), weight.dtype),
        grid=grid,
        in_specs=[
            pl.BlockSpec((tb, 1), lambda i: (i, 0)),     # token-index block
            pl.BlockSpec((vp, ep), lambda i: (0, 0)),    # full table every step
        ],
        out_specs=pl.BlockSpec((tb, ep), lambda i: (i, 0)),
        compiler_params=pltpu.CompilerParams(
            dimension_semantics=("parallel",),           # token blocks independent
        ),
        cost_estimate=pl.CostEstimate(
            flops=flops, transcendentals=0, bytes_accessed=bytes_accessed),
    )(idx2, wpad)

    return out[:n, :e]


class UnitEmbeddings:
    """JAX/Pallas port of the PyTorch UnitEmbeddings forward pass.

    vocab: dict token -> index, weight: (len(vocab), emb_size) table.
    """

    def __init__(self, vocab, emb_size, key):
        self.vocab = vocab
        self.emb_size = emb_size
        self.weight = jax.random.normal(
            key, (len(vocab), emb_size), dtype=jnp.float32)

    def _compute_boundaries(self, token_lists):
        return [np.cumsum([0] + [len(unit) for unit in item]) for item in token_lists]

    def forward(self, token_lists):
        # Flatten each item's token lists (what PackedSequencePlus.from_lists does).
        flat_per_item = [[tok for unit in item for tok in unit] for item in token_lists]
        lengths = [len(toks) for toks in flat_per_item]
        all_tokens = list(itertools.chain.from_iterable(flat_per_item))
        idx = jnp.asarray(
            np.array([self.vocab[t] for t in all_tokens], dtype=np.int32))
        all_embs = embedding_lookup(idx, self.weight)    # (sum(lengths), emb_size)
        # TODO(synk): PackedSequencePlus sort/pack bookkeeping is host-side metadata;
        # we return the flat embedding matrix plus per-item lengths instead.
        return (all_embs, lengths), self._compute_boundaries(token_lists)


if __name__ == "__main__":
    key = jax.random.PRNGKey(0)

    # Small, deterministic setup: vocab of 40 tokens, emb_size=32, batch=2 items.
    vocab_tokens = [f"tok{i}" for i in range(40)]
    vocab = {t: i for i, t in enumerate(vocab_tokens)}
    emb_size = 32

    module = UnitEmbeddings(vocab, emb_size, key)

    token_lists = [
        [["tok1", "tok5"], ["tok7"], ["tok0", "tok2", "tok3"]],
        [["tok9"], ["tok4", "tok8", "tok6", "tok10"], ["tok39"]],
    ]

    (all_embs, lengths), boundaries = module.forward(token_lists)
    all_embs = jax.block_until_ready(all_embs)

    # Reference: plain gather from the same table.
    flat_idx = np.array(
        [vocab[t] for item in token_lists for unit in item for t in unit],
        dtype=np.int32)
    ref = np.asarray(module.weight)[flat_idx]

    assert all_embs.shape == (flat_idx.shape[0], emb_size)
    assert np.allclose(np.asarray(all_embs), ref, atol=1e-6), "embedding gather mismatch"
    assert lengths == [6, 6]
    assert np.array_equal(boundaries[0], np.cumsum([0, 2, 1, 3]))
    assert np.array_equal(boundaries[1], np.cumsum([0, 1, 4, 1]))

    print("KERNEL_OK")
</pallas_src>

<mosaic_0001>
module attributes {stable_mosaic.version = 11 : i64} {
  func.func @_embed_lookup_kernel(%arg0: i32, %arg1: memref<16x1xi32, #tpu.memory_space<vmem>>, %arg2: memref<40x128xf32, #tpu.memory_space<vmem>>, %arg3: memref<16x128xf32, #tpu.memory_space<vmem>>) attributes {dimension_semantics = [#tpu.dimension_semantics<parallel>], iteration_bounds = array<i64: 1>, scalar_prefetch = 0 : i64, scratch_operands = 0 : i64, tpu.core_type = #tpu.core_type<tc>, window_params = [{transform_indices = @transform_0, window_bounds = array<i64: 16, 1>}, {pipeline_mode = #tpu.pipeline_mode<synchronous>, transform_indices = @transform_1, window_bounds = array<i64: 40, 128>}, {transform_indices = @transform_2, window_bounds = array<i64: 16, 128>}]} {
    %c0 = arith.constant 0 : index
    %c0_0 = arith.constant 0 : index
    %0 = vector.load %arg1[%c0, %c0_0] : memref<16x1xi32, #tpu.memory_space<vmem>>, vector<16x1xi32>
    %c0_1 = arith.constant 0 : index
    %c0_2 = arith.constant 0 : index
    %1 = vector.load %arg2[%c0_1, %c0_2] : memref<40x128xf32, #tpu.memory_space<vmem>>, vector<40x128xf32>
    %2 = tpu.iota {dimensions = array<i32: 1>} : vector<16x40xi32>
    %3 = vector.broadcast %0 : vector<16x1xi32> to vector<16x40xi32>
    %4 = arith.cmpi eq, %2, %3 : vector<16x40xi32>
    %5 = arith.extui %4 : vector<16x40xi1> to vector<16x40xi32>
    %6 = arith.sitofp %5 : vector<16x40xi32> to vector<16x40xf32>
    %cst = arith.constant dense<0.000000e+00> : vector<16x128xf32>
    %7 = tpu.matmul %6, %1, %cst {dimension_numbers = #tpu.dot_dimension_numbers<[1], [0], [0], [1], [0, 0, 1, 1], [], []>} : vector<16x40xf32>, vector<40x128xf32>, vector<16x128xf32> -> vector<16x128xf32>
    %c0_3 = arith.constant 0 : index
    %c0_4 = arith.constant 0 : index
    %8 = vector.load %arg3[%c0_3, %c0_4] : memref<16x128xf32, #tpu.memory_space<vmem>>, vector<16x128xf32>
    tpu.vector_store %arg3[%c0_3, %c0_4], %7 {strides = array<i32>} : memref<16x128xf32, #tpu.memory_space<vmem>>, vector<16x128xf32>,
    return
  }
  func.func @transform_0(%arg0: i32) -> (i32, i32) {
    %c0_i32 = arith.constant 0 : i32
    %c0_i32_0 = arith.constant 0 : i32
    return %arg0, %c0_i32 : i32, i32
  }
  func.func @transform_1(%arg0: i32) -> (i32, i32) {
    %c0_i32 = arith.constant 0 : i32
    %c0_i32_0 = arith.constant 0 : i32
    %c0_i32_1 = arith.constant 0 : i32
    return %c0_i32, %c0_i32_0 : i32, i32
  }
  func.func @transform_2(%arg0: i32) -> (i32, i32) {
    %c0_i32 = arith.constant 0 : i32
    %c0_i32_0 = arith.constant 0 : i32
    return %arg0, %c0_i32 : i32, i32
  }
}

</mosaic_0001>

<llo_original>
// kernel: tpu_custom_call.1
$region0: #{tpu_custom_call.1}
  #allocation0 [shape = 'u32[]', space=smem, size = 0x4, offset = 0x4, fixed_abs, tag = 'smem constant byte address 0x4 - core index']
  #allocation1 [shape = 'u32[144,128]{1,0:T(1,128)}', space=vmem, size = 0x12000, scoped, tag = 'internal scratch']
  %s0 = inlined_call_operand.vmem [shape: s32[16,1], index: 0, kind: input, shape index: {}]
  %s1 = inlined_call_operand.hbm [shape: f32[40,128], index: 1, kind: input, shape index: {}]
  %s2 = inlined_call_operand.hbm [shape: f32[16,128], index: 2, kind: output, shape index: {}]
  %s3 = sld [smem:[#allocation0]]
  $region22: #{tpu_custom_call.1} parent=0
    _
  %s5 = ssub.s32 1, %s3
  %s6 = scalar_select 0, %s5, %s3
  $region1: #{tpu_custom_call.1} parent=0
    #allocation2 [shape = 'u8[20480]{0}', space=vmem, size = 0x5000, scoped, tag = 'input window, operand 1, single buffered']
    #allocation3 [shape = 's32[1]{0}', space=sflag, size = 0x4, scoped, tag = 'scoped memory for tpu_custom_call.1']
    #allocation4 [shape = 's32[1]{0}', space=sflag, size = 0x4, scoped, tag = 'scoped memory for tpu_custom_call.1']
    #allocation5 [shape = 'u8[8192]{0}', space=vmem, size = 0x2000, scoped, tag = 'output window, operand 0, single buffered']
    %7 = vsyncpa [#allocation3], 0
    %8 = vsyncpa [#allocation4], 0
    // Predicated region
    $region2: #{tpu_custom_call.1} parent=1 // pred_check
      _
    $region3: #{tpu_custom_call.1} parent=1 // pred_check_branch
      %10 = sbr.rel (0) target = $region5
    $region4: #{tpu_custom_call.1} parent=1 // pred_region
      _
    $region5: #{tpu_custom_call.1} parent=1 // pred_fallthru
      _
    // Predicated region
    $region6: #{tpu_custom_call.1} parent=1 // pred_check
      _
    $region7: #{tpu_custom_call.1} parent=1 // pred_check_branch
      %12 = sbr.rel (0) target = $region9
    $region8: #{tpu_custom_call.1} parent=1 // pred_region
      %s14 = ssub.s32 640, 640
      %15 = vsyncadd [#allocation3], %s14
      %s16 = sshll.u32 [#allocation2], 4
      %s17 = int_to_ptr.vmem [resolvable:$true] %s16
      %22 = dma.hbm_to_vmem [thread:$0]  %s1, 640, %s17, [#allocation3], 128, 128, 8
    $region9: #{tpu_custom_call.1} parent=1 // pred_fallthru
      _
    // Predicated region
    $region10: #{tpu_custom_call.1} parent=1 // pred_check
      _
    $region11: #{tpu_custom_call.1} parent=1 // pred_check_branch
      %24 = sbr.rel (0) target = $region13
    $region12: #{tpu_custom_call.1} parent=1 // pred_region
      %25 = dma.done [#allocation3], 640
    $region13: #{tpu_custom_call.1} parent=1 // pred_fallthru
      _
    %v26 = vld [vmem:[%s0] sm:$0xff]
    %v27 = vld [vmem:[%s0 + $0x8] sm:$0xff]
    %v28 = vld [vmem:[#allocation2] sm:$0xff]
    %v29 = vld [vmem:[#allocation2 + $0x8] sm:$0xff]
    %v30 = vld [vmem:[#allocation2 + $0x10] sm:$0xff]
    %v31 = vld [vmem:[#allocation2 + $0x18] sm:$0xff]
    %v32 = vld [vmem:[#allocation2 + $0x20] sm:$0xff]
    %v33 = vlaneseq
    %v34 = vand.u32 %v33, 127
    %35 = vset.pattern.permute.xlu0 0
    %36 = vperm.xlu0 %35, %v26
    %v37 = vpop.permute.xlu0 %36
    %38 = vset.pattern.permute.xlu0 0
    %39 = vperm.xlu0 %38, %v27
    %v40 = vpop.permute.xlu0 %39
    %vm41 = vcmp.eq.s32.totalorder %v34, %v37
    %vm42 = vcmp.eq.s32.totalorder %v34, %v40
    %v43 = vsel %vm41, 1, 0
    %v44 = vsel %vm42, 1, 0
    %v45 = vcvt.s32.f32 %v43
    %v46 = vcvt.s32.f32 %v44
    %vm47 = vcmask 326656
    %v49 = vsel %vm47, %v45, 0
    %v52 = vsel %vm47, %v46, 0
    %54 = vmatprep.subr.mxu0 0.0
    %55 = vmatpush1.msra.mxu0 %v28
    %56 = vmatprep.subr.mxu0 0.0
    %57 = vmatpush1.msra.mxu0 %v29
    %58 = vmatprep.subr.mxu0 0.0
    %59 = vmatpush1.msra.mxu0 %v30
    %60 = vmatprep.subr.mxu0 0.0
    %61 = vmatpush1.msra.mxu0 %v31
    %62 = vmatprep.subr.mxu0 0.0
    %63 = vmatpush1.msra.mxu0 %v32
    %64 = vmatprep.subr.mxu0 0.0
    %65 = vmatpush1.msra.mxu0 0.0
    %66 = vmatprep.subr.mxu0 0.0
    %67 = vmatpush1.msra.mxu0 0.0
    %68 = vmatprep.subr.mxu0 0.0
    %69 = vmatpush1.msra.mxu0 0.0
    %70 = vmatprep.subr.mxu0 0.0
    %71 = vmatpush1.msra.mxu0 0.0
    %72 = vmatprep.subr.mxu0 0.0
    %73 = vmatpush1.msra.mxu0 0.0
    %74 = vmatprep.subr.mxu0 0.0
    %75 = vmatpush1.msra.mxu0 0.0
    %76 = vmatprep.subr.mxu0 0.0
    %77 = vmatpush1.msra.mxu0 0.0
    %78 = vmatprep.subr.mxu0 0.0
    %79 = vmatpush1.msra.mxu0 0.0
    %80 = vmatprep.subr.mxu0 0.0
    %81 = vmatpush1.msra.mxu0 0.0
    %82 = vmatprep.subr.mxu0 0.0
    %83 = vmatpush1.msra.mxu0 0.0
    %84 = vmatprep.subr.mxu0 0.0
    %85 = vmatpush1.msra.mxu0 0.0
    %86 = vmatprep.subr.mxu0 0.0
    %87 = vmatpush1.msra.mxu0 0.0
    %88 = vmatprep.subr.mxu0 0.0
    %89 = vmatpush1.msra.mxu0 0.0
    %90 = vmatprep.subr.mxu0 0.0
    %91 = vmatpush1.msra.mxu0 0.0
    %92 = vmatprep.subr.mxu0 0.0
    %93 = vmatpush1.msra.mxu0 0.0
    %94 = vmatprep.subr.mxu0 0.0
    %95 = vmatpush1.msra.mxu0 0.0
    %96 = vmatprep.subr.mxu0 0.0
    %97 = vmatpush1.msra.mxu0 0.0
    %98 = vmatprep.subr.mxu0 0.0
    %99 = vmatpush1.msra.mxu0 0.0
    %100 = vmatprep.subr.mxu0 0.0
    %101 = vmatpush1.msra.mxu0 0.0
    %102 = vmatprep.subr.mxu0 0.0
    %103 = vmatpush1.msra.mxu0 0.0
    %104 = vmatprep.subr.mxu0 0.0
    %105 = vmatpush1.msra.mxu0 0.0
    %106 = vmatprep.subr.mxu0 0.0
    %107 = vmatpush1.msra.mxu0 0.0
    %108 = vmatprep.subr.mxu0 0.0
    %109 = vmatpush1.msra.mxu0 0.0
    %110 = vmatprep.subr.mxu0 0.0
    %111 = vmatpush1.msra.mxu0 0.0
    %112 = vmatprep.subr.mxu0 0.0
    %113 = vmatpush1.msra.mxu0 0.0
    %114 = vmatprep.subr.mxu0 0.0
    %115 = vmatpush1.msra.mxu0 0.0
    %116 = vmatprep.subr.mxu0 0.0
    %117 = vmatpush1.msra.mxu0 0.0
    %118 = vmatprep.mubr.f32.mxu0 0.0
    %119 = vmatmul.mubr.f32.gmra.mrb[0].mxu0 %v49
    %v120 = vpop.f32.mrb[0].mxu0
    %v121 = vadd.f32 0.0, %v120
    %v122 = vpop.f32.mrb[0].mxu0
    %123 = vmatprep.mubr.f32.mxu0 0.0
    %124 = vmatmul.mubr.f32.gmra.mrb[0].mxu0 %v52
    %v125 = vpop.f32.mrb[0].mxu0
    %v126 = vadd.f32 0.0, %v125
    %v127 = vpop.f32.mrb[0].mxu0
    %128 = vdwg.mxu0
    %129 = vst [vmem:[#allocation5] sm:$0xff] %v121
    %130 = vst [vmem:[#allocation5 + $0x8] sm:$0xff] %v126
    // Predicated region
    $region14: #{tpu_custom_call.1} parent=1 // pred_check
      _
    $region15: #{tpu_custom_call.1} parent=1 // pred_check_branch
      %132 = sbr.rel (0) target = $region17
    $region16: #{tpu_custom_call.1} parent=1 // pred_region
      %s134 = ssub.s32 256, 256
      %135 = vsyncadd [#allocation4], %s134
      %s136 = sshll.u32 [#allocation5], 4
      %s137 = int_to_ptr.vmem [resolvable:$true] %s136
      %142 = dma.vmem_to_hbm [thread:$0]  %s137, 256, %s2, [#allocation4], 128, 128, 8
    $region17: #{tpu_custom_call.1} parent=1 // pred_fallthru
      _
    // Predicated region
    $region18: #{tpu_custom_call.1} parent=1 // pred_check
      _
    $region19: #{tpu_custom_call.1} parent=1 // pred_check_branch
      %144 = sbr.rel (0) target = $region21
    $region20: #{tpu_custom_call.1} parent=1 // pred_region
      %145 = dma.done [#allocation4], 256
    $region21: #{tpu_custom_call.1} parent=1 // pred_fallthru
      _
    %146 = vsyncpa [#allocation3], 1
    %147 = vsyncpa [#allocation4], 1

</llo_original>
